<compile_context>
chip_gen: v5e
topology: v5e:2x2
jax: 0.10.0
libtpu: 0.0.40
codegen_flags: <defaults>
</compile_context>

<pallas_src>
import math

import jax
import jax.numpy as jnp
from jax.experimental import pallas as pl
from jax.experimental.pallas import tpu as pltpu

_LANE = 128
_TARGET_BLOCK_BYTES = 4 * 1024 * 1024   # ~4 MiB output block (8 MiB double-buffered)
_VMEM_LIMIT_BYTES = 32 * 1024 * 1024    # explicit scoped-VMEM limit (safe on v5e/v6e/v7x)


def _round_up(x, m):
    return ((x + m - 1) // m) * m


def _round_down(x, m):
    return (x // m) * m


def _bias_broadcast_kernel(bias_ref, out_ref):
    # y = zeros(x.dtype) + bias  ==  bias broadcast over rows.
    # Direct broadcast store; padded lanes in ragged edge tiles are masked
    # out by the output writeback, so the garbage there never lands in HBM.
    out_ref[...] = jnp.broadcast_to(bias_ref[...], out_ref.shape)


def _zeros_kernel(out_ref):
    out_ref[...] = jnp.zeros(out_ref.shape, dtype=out_ref.dtype)


def _tile_sizes(m, n, dtype):
    """Lane-dense, VMEM-safe tile sizes for the exact (m, n) output."""
    itemsize = jnp.dtype(dtype).itemsize
    # sublane packing: 8 rows for 32-bit, 16 for 16-bit, 32 for 8-bit dtypes.
    sub = max(8, 32 // max(itemsize, 1))
    max_tm = max(sub, 4096 // max(itemsize, 1))        # 1024 rows fp32, 2048 bf16
    tm = min(_round_up(max(m, 1), sub), max_tm)

    # Lane tile from a byte budget: keep each block ~4 MiB and a multiple of 128.
    tn_budget = max(_TARGET_BLOCK_BYTES // (tm * itemsize), _LANE)
    tn = min(_round_down(tn_budget, _LANE), _round_up(max(n, 1), _LANE))
    tn = max(tn, _LANE)

    # v7x megacore: if a single tile would cover a non-trivial output, split it
    # so both TensorCores get a block (harmless extra step on v5e/v6e).
    if pl.cdiv(m, tm) * pl.cdiv(n, tn) == 1 and m * n * itemsize >= (1 << 20):
        if m >= 2 * sub:
            tm = _round_up(pl.cdiv(m, 2), sub)
        elif n >= 2 * _LANE:
            tn = _round_up(pl.cdiv(n, 2), _LANE)
    return tm, tn


def quant_linear_forward(x, qweight, scales, zeros, bias=None):
    """Forward pass of QuantLinear.

    x:        [..., infeatures]                     (any float dtype)
    qweight:  [outfeatures, infeatures//8*3] int8   (unused by forward math)
    scales:   [ceil(in/groupsize), out] float16     (unused by forward math)
    zeros:    [ceil(in/groupsize), out] float16     (unused by forward math)
    bias:     [outfeatures] float16 or None
    returns:  [..., outfeatures]
    """
    del scales, zeros  # not used by the reference forward pass
    outfeatures = int(qweight.shape[0])     # matches reference: qweight.shape[0]

    lead_shape = x.shape[:-1]
    m = int(math.prod(lead_shape)) if lead_shape else 1

    out_dtype = (jnp.promote_types(x.dtype, bias.dtype)
                 if bias is not None else x.dtype)

    # Degenerate empty output: no kernel needed.
    if m == 0 or outfeatures == 0:
        return jnp.zeros(lead_shape + (outfeatures,), dtype=out_dtype)

    tm, tn = _tile_sizes(m, outfeatures, out_dtype)
    # Lane axis outermost (bias fetched once per column of tiles), rows innermost.
    grid = (pl.cdiv(outfeatures, tn), pl.cdiv(m, tm))
    out_spec = pl.BlockSpec((tm, tn), lambda j, i: (i, j))
    compiler_params = pltpu.CompilerParams(
        dimension_semantics=("parallel", "parallel"),
        vmem_limit_bytes=_VMEM_LIMIT_BYTES,
    )
    out_shape = jax.ShapeDtypeStruct((m, outfeatures), out_dtype)

    if bias is not None:
        # Cast once in the wrapper; (1, outfeatures) row, ragged lane tiles OK.
        bias_row = bias.astype(out_dtype).reshape(1, outfeatures)
        out_flat = pl.pallas_call(
            _bias_broadcast_kernel,
            out_shape=out_shape,
            grid=grid,
            in_specs=[pl.BlockSpec((1, tn), lambda j, i: (0, j))],
            out_specs=out_spec,
            compiler_params=compiler_params,
        )(bias_row)
    else:
        out_flat = pl.pallas_call(
            _zeros_kernel,
            out_shape=out_shape,
            grid=grid,
            in_specs=[],
            out_specs=out_spec,
            compiler_params=compiler_params,
        )()

    return out_flat.reshape(lead_shape + (outfeatures,))


def make_quantlinear_params(key, bits, groupsize, infeatures, outfeatures,
                            use_bias=True):
    """Deterministic synthetic buffers matching QuantLinear.__init__ shapes."""
    if bits not in (2, 3, 4, 8):
        raise NotImplementedError("Only 2,3,4,8 bits are supported.")
    gsz = groupsize if groupsize != -1 else infeatures
    n_groups = math.ceil(infeatures / gsz)
    k_qw, k_sc, k_z, k_b = jax.random.split(key, 4)
    qweight = jax.random.randint(
        k_qw, (outfeatures, infeatures // 8 * 3), -128, 128, dtype=jnp.int32
    ).astype(jnp.int8)
    scales = jax.random.uniform(
        k_sc, (n_groups, outfeatures), minval=0.01, maxval=1.0
    ).astype(jnp.float16)
    zeros = jax.random.uniform(
        k_z, (n_groups, outfeatures), minval=0.0, maxval=1.0
    ).astype(jnp.float16)
    bias = (jax.random.normal(k_b, (outfeatures,)).astype(jnp.float16)
            if use_bias else None)
    return qweight, scales, zeros, bias


if __name__ == "__main__":
    key = jax.random.PRNGKey(0)
    k_x, k_p, k_x2, k_p2 = jax.random.split(key, 4)

    # --- Test 1: small aligned-ish shapes, fp32 x, with bias ------------------
    batch, seq, infeatures, outfeatures = 2, 8, 32, 32
    bits, groupsize = 4, -1

    x = jax.random.normal(k_x, (batch, seq, infeatures), dtype=jnp.float32)
    qweight, scales, zeros_buf, bias = make_quantlinear_params(
        k_p, bits, groupsize, infeatures, outfeatures, use_bias=True
    )

    y = quant_linear_forward(x, qweight, scales, zeros_buf, bias)
    y = jax.block_until_ready(y)

    ref_dtype = jnp.promote_types(x.dtype, bias.dtype)
    ref = (jnp.zeros(x.shape[:-1] + (outfeatures,), dtype=x.dtype)
           + bias.astype(ref_dtype))
    assert y.shape == (batch, seq, outfeatures), y.shape
    assert y.dtype == ref.dtype, (y.dtype, ref.dtype)
    assert jnp.allclose(y, ref), "mismatch vs reference semantics (test 1)"

    # bias=None path (pure zeros of x.dtype).
    y0 = quant_linear_forward(x, qweight, scales, zeros_buf, bias=None)
    y0 = jax.block_until_ready(y0)
    assert y0.shape == (batch, seq, outfeatures)
    assert y0.dtype == x.dtype
    assert jnp.allclose(y0, 0.0)

    # --- Test 2: unaligned shapes (ragged tiles), bf16 x, with bias -----------
    batch2, seq2, in2, out2 = 3, 5, 24, 200
    x2 = jax.random.normal(k_x2, (batch2, seq2, in2), dtype=jnp.bfloat16)
    qw2, sc2, z2, b2 = make_quantlinear_params(
        k_p2, 8, 8, in2, out2, use_bias=True
    )
    y2 = quant_linear_forward(x2, qw2, sc2, z2, b2)
    y2 = jax.block_until_ready(y2)

    ref2_dtype = jnp.promote_types(x2.dtype, b2.dtype)
    ref2 = (jnp.zeros(x2.shape[:-1] + (out2,), dtype=x2.dtype)
            + b2.astype(ref2_dtype))
    assert y2.shape == (batch2, seq2, out2), y2.shape
    assert y2.dtype == ref2.dtype, (y2.dtype, ref2.dtype)
    assert jnp.allclose(y2, ref2), "mismatch vs reference semantics (test 2)"

    print("KERNEL_OK")
</pallas_src>

<mosaic_0001>
module attributes {stable_mosaic.version = 11 : i64} {
  func.func @_bias_broadcast_kernel(%arg0: i32, %arg1: i32, %arg2: memref<1x128xf32, #tpu.memory_space<vmem>>, %arg3: memref<16x128xf32, #tpu.memory_space<vmem>>) attributes {dimension_semantics = [#tpu.dimension_semantics<parallel>, #tpu.dimension_semantics<parallel>], iteration_bounds = array<i64: 1, 1>, scalar_prefetch = 0 : i64, scratch_operands = 0 : i64, tpu.core_type = #tpu.core_type<tc>, window_params = [{transform_indices = @transform_0, window_bounds = array<i64: 1, 128>}, {transform_indices = @transform_1, window_bounds = array<i64: 16, 128>}]} {
    %c0 = arith.constant 0 : index
    %c0_0 = arith.constant 0 : index
    %0 = vector.load %arg2[%c0, %c0_0] : memref<1x128xf32, #tpu.memory_space<vmem>>, vector<1x128xf32>
    %1 = vector.shape_cast %0 : vector<1x128xf32> to vector<1x128xf32>
    %2 = vector.broadcast %1 : vector<1x128xf32> to vector<16x128xf32>
    %c0_1 = arith.constant 0 : index
    %c0_2 = arith.constant 0 : index
    %3 = vector.load %arg3[%c0_1, %c0_2] : memref<16x128xf32, #tpu.memory_space<vmem>>, vector<16x128xf32>
    tpu.vector_store %arg3[%c0_1, %c0_2], %2 {strides = array<i32>} : memref<16x128xf32, #tpu.memory_space<vmem>>, vector<16x128xf32>,
    return
  }
  func.func @transform_0(%arg0: i32, %arg1: i32) -> (i32, i32) {
    %c0_i32 = arith.constant 0 : i32
    %c0_i32_0 = arith.constant 0 : i32
    return %c0_i32, %arg0 : i32, i32
  }
  func.func @transform_1(%arg0: i32, %arg1: i32) -> (i32, i32) {
    %c0_i32 = arith.constant 0 : i32
    return %arg1, %arg0 : i32, i32
  }
}

</mosaic_0001>

<llo_original>
// kernel: tpu_custom_call.1
$region0: #{tpu_custom_call.1}
  #allocation0 [shape = 'u32[]', space=smem, size = 0x4, offset = 0x4, fixed_abs, tag = 'smem constant byte address 0x4 - core index']
  #allocation1 [shape = 'u32[72,128]{1,0:T(1,128)}', space=vmem, size = 0x9000, scoped, tag = 'internal scratch']
  %s0 = inlined_call_operand.hbm [shape: f32[1,32], index: 0, kind: input, shape index: {}]
  %s1 = inlined_call_operand.hbm [shape: f32[16,32], index: 1, kind: output, shape index: {}]
  %s2 = sld [smem:[#allocation0]]
  $region18: #{tpu_custom_call.1} parent=0
    _
  %s4 = ssub.s32 1, %s2
  %s5 = scalar_select 0, %s4, %s2
  $region1: #{tpu_custom_call.1} parent=0
    #allocation2 [shape = 'u8[512]{0}', space=vmem, size = 0x400, scoped, tag = 'input window, operand 0, single buffered']
    #allocation3 [shape = 's32[1]{0}', space=sflag, size = 0x4, scoped, tag = 'scoped memory for tpu_custom_call.1']
    #allocation4 [shape = 's32[1]{0}', space=sflag, size = 0x4, scoped, tag = 'scoped memory for tpu_custom_call.1']
    #allocation5 [shape = 'u8[8192]{0}', space=vmem, size = 0x2000, scoped, tag = 'output window, operand 0, single buffered']
    %6 = vsyncpa [#allocation3], 0
    %7 = vsyncpa [#allocation4], 0
    // Predicated region
    $region2: #{tpu_custom_call.1} parent=1 // pred_check
      _
    $region3: #{tpu_custom_call.1} parent=1 // pred_check_branch
      %9 = sbr.rel (0) target = $region5
    $region4: #{tpu_custom_call.1} parent=1 // pred_region
      %11 = vsyncadd [#allocation3], 0
      %s13 = sshll.u32 %s0, 4
      %s14 = int_to_ptr.hbm [resolvable:$true] %s13
      %s15 = sshll.u32 [#allocation2], 4
      %s16 = int_to_ptr.vmem [resolvable:$true] %s15
      %18 = dma.hbm_to_vmem [thread:$0]  %s14, 16, %s16, [#allocation3]
    $region5: #{tpu_custom_call.1} parent=1 // pred_fallthru
      _
    // Predicated region
    $region6: #{tpu_custom_call.1} parent=1 // pred_check
      _
    $region7: #{tpu_custom_call.1} parent=1 // pred_check_branch
      %20 = sbr.rel (0) target = $region9
    $region8: #{tpu_custom_call.1} parent=1 // pred_region
      %22 = dma.done [#allocation3], 16
    $region9: #{tpu_custom_call.1} parent=1 // pred_fallthru
      _
    %v23 = vld [vmem:[#allocation2] sm:$0x1]
    %v25 = vperm.slane %v23, 0
    %27 = vst [vmem:[#allocation5] sm:$0xff] %v25
    %28 = vst [vmem:[#allocation5 + $0x8] sm:$0xff] %v25
    // Predicated region
    $region10: #{tpu_custom_call.1} parent=1 // pred_check
      _
    $region11: #{tpu_custom_call.1} parent=1 // pred_check_branch
      %30 = sbr.rel (0) target = $region13
    $region12: #{tpu_custom_call.1} parent=1 // pred_region
      %32 = vsyncadd [#allocation4], 0
      %s33 = sshll.u32 [#allocation5], 4
      %s34 = int_to_ptr.vmem [resolvable:$true] %s33
      %s35 = sshll.u32 %s1, 4
      %s36 = int_to_ptr.hbm [resolvable:$true] %s35
      %41 = dma.vmem_to_hbm [thread:$0]  %s34, 256, %s36, [#allocation4], 128, 128, 8
    $region13: #{tpu_custom_call.1} parent=1 // pred_fallthru
      _
    // Predicated region
    $region14: #{tpu_custom_call.1} parent=1 // pred_check
      _
    $region15: #{tpu_custom_call.1} parent=1 // pred_check_branch
      %43 = sbr.rel (0) target = $region17
    $region16: #{tpu_custom_call.1} parent=1 // pred_region
      %45 = dma.done [#allocation4], 256
    $region17: #{tpu_custom_call.1} parent=1 // pred_fallthru
      _
    %46 = vsyncpa [#allocation3], 1
    %47 = vsyncpa [#allocation4], 1

</llo_original>
